<compile_context>
chip_gen: v5e
topology: v5e:2x2
jax: 0.10.0
libtpu: 0.0.40
codegen_flags: <defaults>
</compile_context>

<pallas_src>
import jax
import jax.numpy as jnp
from jax.experimental import pallas as pl
from jax.experimental.pallas import tpu as pltpu


_VMEM_LIMIT_BYTES = 48 * 1024 * 1024      # < v7x 64 MiB physical VMEM
_OPERAND_BUDGET_BYTES = 8 * 1024 * 1024   # per-tile (single-buffer) operand budget


def _round_up(x, m):
    return ((x + m - 1) // m) * m


# ----------------------------------------------------------------------------
# Pallas kernels
# ----------------------------------------------------------------------------
def _conv_relu_pool_kernel(p_ref, w_ref, b_ref, o_ref):
    """Fused 3x3 conv (im2col matmul) + 2x2/2 max-pool + bias + ReLU.

    p_ref : (4, K, tb*P)  im2col patches, one leading slice per pool corner,
                          columns ordered (sample, pooled-y, pooled-x)
    w_ref : (C, K)        conv weight, pre-flattened (PyTorch (cin,ky,kx) order)
    b_ref : (C, 1)        bias
    o_ref : (C, tb*P)     pooled + ReLU activation (lane-dense)
    """
    w = w_ref[...]
    m = jnp.maximum(
        jnp.maximum(jnp.dot(w, p_ref[0], preferred_element_type=jnp.float32),
                    jnp.dot(w, p_ref[1], preferred_element_type=jnp.float32)),
        jnp.maximum(jnp.dot(w, p_ref[2], preferred_element_type=jnp.float32),
                    jnp.dot(w, p_ref[3], preferred_element_type=jnp.float32)))
    # max-pool commutes with (+bias, ReLU): both are monotone, so this is exact.
    o_ref[...] = jnp.maximum(m + b_ref[...], 0.0).astype(o_ref.dtype)


def _fc_kernel(x_ref, w_ref, b_ref, o_ref):
    o_ref[...] = (jnp.dot(x_ref[...], w_ref[...],
                          preferred_element_type=jnp.float32)
                  + b_ref[...]).astype(o_ref.dtype)


# ----------------------------------------------------------------------------
# Batch-tile selection (alignment-aware, prefers grid >= 2 for v7x megacore)
# ----------------------------------------------------------------------------
def _pick_batch_tile(n, per_sample_units, align, per_sample_bytes, max_tb):
    """Largest divisor tb of n with tb*per_sample_units % align == 0 (or tb==n),
    under the per-tile VMEM operand budget; prefers leaving grid >= 2."""
    cap = max(1, min(max_tb, _OPERAND_BUDGET_BYTES // max(per_sample_bytes, 1)))

    def best(limit):
        for tb in range(min(limit, n), 0, -1):
            if n % tb == 0 and ((tb * per_sample_units) % align == 0 or tb == n):
                return tb
        return None

    if n >= 2:
        tb = best(min(cap, n // 2))
        if tb is not None:
            return tb
    tb = best(cap)
    return tb if tb is not None else n


# ----------------------------------------------------------------------------
# pallas_call wrappers
# ----------------------------------------------------------------------------
def conv_relu_pool(patches, w, b, pool_p):
    """patches (4, K, N*P) corner-major; w (C, K); b (C, 1) -> (C, N*P)."""
    _, k, cols = patches.shape
    c = w.shape[0]
    n = cols // pool_p
    per_sample_vmem = 4 * pool_p * (4 * _round_up(k, 8) + _round_up(c, 8))
    tb = _pick_batch_tile(n, pool_p, 128, per_sample_vmem, max_tb=128)
    grid = (n // tb,)
    flops = 8 * c * k * cols + 4 * c * cols          # 4 corner matmuls + max/bias/relu
    bytes_accessed = 4 * (4 * k * cols + c * k + c + c * cols)
    return pl.pallas_call(
        _conv_relu_pool_kernel,
        out_shape=jax.ShapeDtypeStruct((c, cols), jnp.float32),
        grid=grid,
        in_specs=[
            pl.BlockSpec((4, k, tb * pool_p), lambda i: (0, 0, i)),  # batch-tiled patches
            pl.BlockSpec((c, k), lambda i: (0, 0)),                  # full weight
            pl.BlockSpec((c, 1), lambda i: (0, 0)),                  # full bias
        ],
        out_specs=pl.BlockSpec((c, tb * pool_p), lambda i: (0, i)),
        compiler_params=pltpu.CompilerParams(
            dimension_semantics=("parallel",),
            vmem_limit_bytes=_VMEM_LIMIT_BYTES),
        cost_estimate=pl.CostEstimate(flops=flops, transcendentals=0,
                                      bytes_accessed=bytes_accessed),
    )(patches, w, b)


def fc_layer(x, w, b):
    """x (N, F), w (F, C) [pre-transposed], b (1, C) -> (N, C)."""
    n, f = x.shape
    c = w.shape[1]
    per_sample_vmem = 4 * (_round_up(f, 128) + _round_up(c, 128))
    tb = _pick_batch_tile(n, 1, 8, per_sample_vmem, max_tb=512)
    grid = (n // tb,)
    return pl.pallas_call(
        _fc_kernel,
        out_shape=jax.ShapeDtypeStruct((n, c), jnp.float32),
        grid=grid,
        in_specs=[
            pl.BlockSpec((tb, f), lambda i: (i, 0)),
            pl.BlockSpec((f, c), lambda i: (0, 0)),
            pl.BlockSpec((1, c), lambda i: (0, 0)),
        ],
        out_specs=pl.BlockSpec((tb, c), lambda i: (i, 0)),
        compiler_params=pltpu.CompilerParams(
            dimension_semantics=("parallel",),
            vmem_limit_bytes=_VMEM_LIMIT_BYTES),
        cost_estimate=pl.CostEstimate(
            flops=2 * n * f * c, transcendentals=0,
            bytes_accessed=4 * (n * f + f * c + c + n * c)),
    )(x, w, b)


# ----------------------------------------------------------------------------
# Glue: pool-corner-grouped im2col (XLA side)
# ----------------------------------------------------------------------------
def _im2col_pool_patches(x_nchw):
    """(N, Cin, H, W) -> (4, 9*Cin, N*(H//2)*(W//2)).

    Leading axis = 2x2 pool-window corner (dy*2+dx); K ordered (cin, ky, kx)
    to match PyTorch's Conv2d weight flatten; columns ordered (sample, py, px).
    """
    n, cin, h, w = x_nchw.shape
    xp = jnp.pad(x_nchw, ((0, 0), (0, 0), (1, 1), (1, 1)))
    views = [xp[:, :, ky:ky + h, kx:kx + w] for ky in range(3) for kx in range(3)]
    pat = jnp.stack(views, axis=2)                        # (N, Cin, 9, H, W)
    pat = pat.reshape(n, cin * 9, h, w)                   # K = (cin, ky, kx)
    pat = pat.reshape(n, cin * 9, h // 2, 2, w // 2, 2)   # (N, K, py, dy, px, dx)
    pat = pat.transpose(3, 5, 1, 0, 2, 4)                 # (dy, dx, K, N, py, px)
    return pat.reshape(4, cin * 9, n * (h // 2) * (w // 2))


# ----------------------------------------------------------------------------
# Parameters
# ----------------------------------------------------------------------------
def init_params(key, num_classes=10):
    k1, k2, k3, k4, k5, k6 = jax.random.split(key, 6)
    return {
        "conv1_w": 0.1 * jax.random.normal(k1, (8, 1, 3, 3), jnp.float32),
        "conv1_b": 0.1 * jax.random.normal(k2, (8,), jnp.float32),
        "conv2_w": 0.1 * jax.random.normal(k3, (16, 8, 3, 3), jnp.float32),
        "conv2_b": 0.1 * jax.random.normal(k4, (16,), jnp.float32),
        "fc1_w": 0.05 * jax.random.normal(k5, (num_classes, 16 * 7 * 7), jnp.float32),
        "fc1_b": 0.05 * jax.random.normal(k6, (num_classes,), jnp.float32),
    }


def prepare_params(params):
    """Hoist all per-forward reshapes/transposes out of the hot path (done once)."""
    c1, c2 = params["conv1_w"], params["conv2_w"]
    return {
        "w1": c1.reshape(c1.shape[0], -1),           # (8, 9)
        "b1": params["conv1_b"].reshape(-1, 1),      # (8, 1)
        "w2": c2.reshape(c2.shape[0], -1),           # (16, 72)
        "b2": params["conv2_b"].reshape(-1, 1),      # (16, 1)
        "fcw": params["fc1_w"].T,                    # (784, 10) pre-transposed
        "fcb": params["fc1_b"].reshape(1, -1),       # (1, 10)
    }


# ----------------------------------------------------------------------------
# Full forward pass (matches PyTorch CNN.forward)
# ----------------------------------------------------------------------------
def cnn_forward(x_nchw, prep):
    n = x_nchw.shape[0]
    p1 = _im2col_pool_patches(x_nchw)                          # (4, 9, N*196)
    a1 = conv_relu_pool(p1, prep["w1"], prep["b1"], 14 * 14)   # (8, N*196)
    a1 = a1.reshape(8, n, 14, 14).transpose(1, 0, 2, 3)        # (N, 8, 14, 14) NCHW
    p2 = _im2col_pool_patches(a1)                              # (4, 72, N*49)
    a2 = conv_relu_pool(p2, prep["w2"], prep["b2"], 7 * 7)     # (16, N*49)
    flat = a2.reshape(16, n, 49).transpose(1, 0, 2).reshape(n, 16 * 49)  # PyTorch order
    return fc_layer(flat, prep["fcw"], prep["fcb"])            # (N, 10)


# ----------------------------------------------------------------------------
# Pure-JAX reference (correctness check only)
# ----------------------------------------------------------------------------
def cnn_reference(x_nchw, params):
    def conv(x, w, b):
        y = jax.lax.conv_general_dilated(
            x, w, window_strides=(1, 1), padding=((1, 1), (1, 1)),
            dimension_numbers=("NCHW", "OIHW", "NCHW"))
        return jax.nn.relu(y + b[None, :, None, None])

    def pool(x):
        return jax.lax.reduce_window(
            x, -jnp.inf, jax.lax.max, (1, 1, 2, 2), (1, 1, 2, 2), "VALID")

    x = pool(conv(x_nchw, params["conv1_w"], params["conv1_b"]))
    x = pool(conv(x, params["conv2_w"], params["conv2_b"]))
    x = x.reshape(x.shape[0], -1)
    return x @ params["fc1_w"].T + params["fc1_b"]


if __name__ == "__main__":
    key = jax.random.PRNGKey(0)
    kx, kp = jax.random.split(key)
    # Spatial size is fixed by fc1 = Linear(16*7*7, 10) -> 28x28 input, 1 channel.
    x = jax.random.normal(kx, (2, 1, 28, 28), jnp.float32)
    params = init_params(kp)
    prep = prepare_params(params)

    fwd = jax.jit(cnn_forward)
    out = jax.block_until_ready(fwd(x, prep))
    ref = jax.block_until_ready(cnn_reference(x, params))

    assert out.shape == (2, 10), out.shape
    assert jnp.allclose(out, ref, rtol=1e-4, atol=1e-4), "mismatch vs reference"
    print("KERNEL_OK")
</pallas_src>

<mosaic_0001>
module attributes {stable_mosaic.version = 11 : i64} {
  func.func @_conv_relu_pool_kernel(%arg0: i32, %arg1: memref<4x9x392xf32, #tpu.memory_space<vmem>>, %arg2: memref<8x9xf32, #tpu.memory_space<vmem>>, %arg3: memref<8x1xf32, #tpu.memory_space<vmem>>, %arg4: memref<8x392xf32, #tpu.memory_space<vmem>>) attributes {dimension_semantics = [#tpu.dimension_semantics<parallel>], iteration_bounds = array<i64: 1>, scalar_prefetch = 0 : i64, scratch_operands = 0 : i64, tpu.core_type = #tpu.core_type<tc>, window_params = [{transform_indices = @transform_0, window_bounds = array<i64: 4, 9, 392>}, {pipeline_mode = #tpu.pipeline_mode<synchronous>, transform_indices = @transform_1, window_bounds = array<i64: 8, 9>}, {pipeline_mode = #tpu.pipeline_mode<synchronous>, transform_indices = @transform_2, window_bounds = array<i64: 8, 1>}, {transform_indices = @transform_3, window_bounds = array<i64: 8, 392>}]} {
    %c0 = arith.constant 0 : index
    %c0_0 = arith.constant 0 : index
    %0 = vector.load %arg2[%c0, %c0_0] : memref<8x9xf32, #tpu.memory_space<vmem>>, vector<8x9xf32>
    %c0_1 = arith.constant 0 : index
    %c0_2 = arith.constant 0 : index
    %c0_3 = arith.constant 0 : index
    %1 = vector.load %arg1[%c0_1, %c0_2, %c0_3] : memref<4x9x392xf32, #tpu.memory_space<vmem>>, vector<1x9x392xf32>
    %2 = vector.shape_cast %1 : vector<1x9x392xf32> to vector<9x392xf32>
    %cst = arith.constant dense<0.000000e+00> : vector<8x392xf32>
    %3 = tpu.matmul %0, %2, %cst {dimension_numbers = #tpu.dot_dimension_numbers<[1], [0], [0], [1], [0, 0, 1, 1], [], []>} : vector<8x9xf32>, vector<9x392xf32>, vector<8x392xf32> -> vector<8x392xf32>
    %c1 = arith.constant 1 : index
    %c0_4 = arith.constant 0 : index
    %c0_5 = arith.constant 0 : index
    %4 = vector.load %arg1[%c1, %c0_4, %c0_5] : memref<4x9x392xf32, #tpu.memory_space<vmem>>, vector<1x9x392xf32>
    %5 = vector.shape_cast %4 : vector<1x9x392xf32> to vector<9x392xf32>
    %cst_6 = arith.constant dense<0.000000e+00> : vector<8x392xf32>
    %6 = tpu.matmul %0, %5, %cst_6 {dimension_numbers = #tpu.dot_dimension_numbers<[1], [0], [0], [1], [0, 0, 1, 1], [], []>} : vector<8x9xf32>, vector<9x392xf32>, vector<8x392xf32> -> vector<8x392xf32>
    %7 = arith.maximumf %3, %6 : vector<8x392xf32>
    %c2 = arith.constant 2 : index
    %c0_7 = arith.constant 0 : index
    %c0_8 = arith.constant 0 : index
    %8 = vector.load %arg1[%c2, %c0_7, %c0_8] : memref<4x9x392xf32, #tpu.memory_space<vmem>>, vector<1x9x392xf32>
    %9 = vector.shape_cast %8 : vector<1x9x392xf32> to vector<9x392xf32>
    %cst_9 = arith.constant dense<0.000000e+00> : vector<8x392xf32>
    %10 = tpu.matmul %0, %9, %cst_9 {dimension_numbers = #tpu.dot_dimension_numbers<[1], [0], [0], [1], [0, 0, 1, 1], [], []>} : vector<8x9xf32>, vector<9x392xf32>, vector<8x392xf32> -> vector<8x392xf32>
    %c3 = arith.constant 3 : index
    %c0_10 = arith.constant 0 : index
    %c0_11 = arith.constant 0 : index
    %11 = vector.load %arg1[%c3, %c0_10, %c0_11] : memref<4x9x392xf32, #tpu.memory_space<vmem>>, vector<1x9x392xf32>
    %12 = vector.shape_cast %11 : vector<1x9x392xf32> to vector<9x392xf32>
    %cst_12 = arith.constant dense<0.000000e+00> : vector<8x392xf32>
    %13 = tpu.matmul %0, %12, %cst_12 {dimension_numbers = #tpu.dot_dimension_numbers<[1], [0], [0], [1], [0, 0, 1, 1], [], []>} : vector<8x9xf32>, vector<9x392xf32>, vector<8x392xf32> -> vector<8x392xf32>
    %14 = arith.maximumf %10, %13 : vector<8x392xf32>
    %15 = arith.maximumf %7, %14 : vector<8x392xf32>
    %c0_13 = arith.constant 0 : index
    %c0_14 = arith.constant 0 : index
    %16 = vector.load %arg3[%c0_13, %c0_14] : memref<8x1xf32, #tpu.memory_space<vmem>>, vector<8x1xf32>
    %17 = vector.broadcast %16 : vector<8x1xf32> to vector<8x392xf32>
    %18 = arith.addf %15, %17 : vector<8x392xf32>
    %cst_15 = arith.constant 0.000000e+00 : f32
    %19 = vector.broadcast %cst_15 : f32 to vector<8x392xf32>
    %20 = arith.maximumf %18, %19 : vector<8x392xf32>
    %c0_16 = arith.constant 0 : index
    %c0_17 = arith.constant 0 : index
    %21 = vector.load %arg4[%c0_16, %c0_17] : memref<8x392xf32, #tpu.memory_space<vmem>>, vector<8x392xf32>
    tpu.vector_store %arg4[%c0_16, %c0_17], %20 {strides = array<i32>} : memref<8x392xf32, #tpu.memory_space<vmem>>, vector<8x392xf32>,
    return
  }
  func.func @transform_0(%arg0: i32) -> (i32, i32, i32) {
    %c0_i32 = arith.constant 0 : i32
    %c0_i32_0 = arith.constant 0 : i32
    %c0_i32_1 = arith.constant 0 : i32
    return %c0_i32, %c0_i32_0, %arg0 : i32, i32, i32
  }
  func.func @transform_1(%arg0: i32) -> (i32, i32) {
    %c0_i32 = arith.constant 0 : i32
    %c0_i32_0 = arith.constant 0 : i32
    %c0_i32_1 = arith.constant 0 : i32
    return %c0_i32, %c0_i32_0 : i32, i32
  }
  func.func @transform_2(%arg0: i32) -> (i32, i32) {
    %c0_i32 = arith.constant 0 : i32
    %c0_i32_0 = arith.constant 0 : i32
    %c0_i32_1 = arith.constant 0 : i32
    return %c0_i32, %c0_i32_0 : i32, i32
  }
  func.func @transform_3(%arg0: i32) -> (i32, i32) {
    %c0_i32 = arith.constant 0 : i32
    %c0_i32_0 = arith.constant 0 : i32
    return %c0_i32, %arg0 : i32, i32
  }
}

module attributes {stable_mosaic.version = 11 : i64} {
  func.func @_conv_relu_pool_kernel(%arg0: i32, %arg1: memref<4x72x98xf32, #tpu.memory_space<vmem>>, %arg2: memref<16x72xf32, #tpu.memory_space<vmem>>, %arg3: memref<16x1xf32, #tpu.memory_space<vmem>>, %arg4: memref<16x98xf32, #tpu.memory_space<vmem>>) attributes {dimension_semantics = [#tpu.dimension_semantics<parallel>], iteration_bounds = array<i64: 1>, scalar_prefetch = 0 : i64, scratch_operands = 0 : i64, tpu.core_type = #tpu.core_type<tc>, window_params = [{transform_indices = @transform_0, window_bounds = array<i64: 4, 72, 98>}, {pipeline_mode = #tpu.pipeline_mode<synchronous>, transform_indices = @transform_1, window_bounds = array<i64: 16, 72>}, {pipeline_mode = #tpu.pipeline_mode<synchronous>, transform_indices = @transform_2, window_bounds = array<i64: 16, 1>}, {transform_indices = @transform_3, window_bounds = array<i64: 16, 98>}]} {
    %c0 = arith.constant 0 : index
    %c0_0 = arith.constant 0 : index
    %0 = vector.load %arg2[%c0, %c0_0] : memref<16x72xf32, #tpu.memory_space<vmem>>, vector<16x72xf32>
    %c0_1 = arith.constant 0 : index
    %c0_2 = arith.constant 0 : index
    %c0_3 = arith.constant 0 : index
    %1 = vector.load %arg1[%c0_1, %c0_2, %c0_3] : memref<4x72x98xf32, #tpu.memory_space<vmem>>, vector<1x72x98xf32>
    %2 = vector.shape_cast %1 : vector<1x72x98xf32> to vector<72x98xf32>
    %cst = arith.constant dense<0.000000e+00> : vector<16x98xf32>
    %3 = tpu.matmul %0, %2, %cst {dimension_numbers = #tpu.dot_dimension_numbers<[1], [0], [0], [1], [0, 0, 1, 1], [], []>} : vector<16x72xf32>, vector<72x98xf32>, vector<16x98xf32> -> vector<16x98xf32>
    %c1 = arith.constant 1 : index
    %c0_4 = arith.constant 0 : index
    %c0_5 = arith.constant 0 : index
    %4 = vector.load %arg1[%c1, %c0_4, %c0_5] : memref<4x72x98xf32, #tpu.memory_space<vmem>>, vector<1x72x98xf32>
    %5 = vector.shape_cast %4 : vector<1x72x98xf32> to vector<72x98xf32>
    %cst_6 = arith.constant dense<0.000000e+00> : vector<16x98xf32>
    %6 = tpu.matmul %0, %5, %cst_6 {dimension_numbers = #tpu.dot_dimension_numbers<[1], [0], [0], [1], [0, 0, 1, 1], [], []>} : vector<16x72xf32>, vector<72x98xf32>, vector<16x98xf32> -> vector<16x98xf32>
    %7 = arith.maximumf %3, %6 : vector<16x98xf32>
    %c2 = arith.constant 2 : index
    %c0_7 = arith.constant 0 : index
    %c0_8 = arith.constant 0 : index
    %8 = vector.load %arg1[%c2, %c0_7, %c0_8] : memref<4x72x98xf32, #tpu.memory_space<vmem>>, vector<1x72x98xf32>
    %9 = vector.shape_cast %8 : vector<1x72x98xf32> to vector<72x98xf32>
    %cst_9 = arith.constant dense<0.000000e+00> : vector<16x98xf32>
    %10 = tpu.matmul %0, %9, %cst_9 {dimension_numbers = #tpu.dot_dimension_numbers<[1], [0], [0], [1], [0, 0, 1, 1], [], []>} : vector<16x72xf32>, vector<72x98xf32>, vector<16x98xf32> -> vector<16x98xf32>
    %c3 = arith.constant 3 : index
    %c0_10 = arith.constant 0 : index
    %c0_11 = arith.constant 0 : index
    %11 = vector.load %arg1[%c3, %c0_10, %c0_11] : memref<4x72x98xf32, #tpu.memory_space<vmem>>, vector<1x72x98xf32>
    %12 = vector.shape_cast %11 : vector<1x72x98xf32> to vector<72x98xf32>
    %cst_12 = arith.constant dense<0.000000e+00> : vector<16x98xf32>
    %13 = tpu.matmul %0, %12, %cst_12 {dimension_numbers = #tpu.dot_dimension_numbers<[1], [0], [0], [1], [0, 0, 1, 1], [], []>} : vector<16x72xf32>, vector<72x98xf32>, vector<16x98xf32> -> vector<16x98xf32>
    %14 = arith.maximumf %10, %13 : vector<16x98xf32>
    %15 = arith.maximumf %7, %14 : vector<16x98xf32>
    %c0_13 = arith.constant 0 : index
    %c0_14 = arith.constant 0 : index
    %16 = vector.load %arg3[%c0_13, %c0_14] : memref<16x1xf32, #tpu.memory_space<vmem>>, vector<16x1xf32>
    %17 = vector.broadcast %16 : vector<16x1xf32> to vector<16x98xf32>
    %18 = arith.addf %15, %17 : vector<16x98xf32>
    %cst_15 = arith.constant 0.000000e+00 : f32
    %19 = vector.broadcast %cst_15 : f32 to vector<16x98xf32>
    %20 = arith.maximumf %18, %19 : vector<16x98xf32>
    %c0_16 = arith.constant 0 : index
    %c0_17 = arith.constant 0 : index
    %21 = vector.load %arg4[%c0_16, %c0_17] : memref<16x98xf32, #tpu.memory_space<vmem>>, vector<16x98xf32>
    tpu.vector_store %arg4[%c0_16, %c0_17], %20 {strides = array<i32>} : memref<16x98xf32, #tpu.memory_space<vmem>>, vector<16x98xf32>,
    return
  }
  func.func @transform_0(%arg0: i32) -> (i32, i32, i32) {
    %c0_i32 = arith.constant 0 : i32
    %c0_i32_0 = arith.constant 0 : i32
    %c0_i32_1 = arith.constant 0 : i32
    return %c0_i32, %c0_i32_0, %arg0 : i32, i32, i32
  }
  func.func @transform_1(%arg0: i32) -> (i32, i32) {
    %c0_i32 = arith.constant 0 : i32
    %c0_i32_0 = arith.constant 0 : i32
    %c0_i32_1 = arith.constant 0 : i32
    return %c0_i32, %c0_i32_0 : i32, i32
  }
  func.func @transform_2(%arg0: i32) -> (i32, i32) {
    %c0_i32 = arith.constant 0 : i32
    %c0_i32_0 = arith.constant 0 : i32
    %c0_i32_1 = arith.constant 0 : i32
    return %c0_i32, %c0_i32_0 : i32, i32
  }
  func.func @transform_3(%arg0: i32) -> (i32, i32) {
    %c0_i32 = arith.constant 0 : i32
    %c0_i32_0 = arith.constant 0 : i32
    return %c0_i32, %arg0 : i32, i32
  }
}

module attributes {stable_mosaic.version = 11 : i64} {
  func.func @_fc_kernel(%arg0: i32, %arg1: memref<2x784xf32, #tpu.memory_space<vmem>>, %arg2: memref<784x10xf32, #tpu.memory_space<vmem>>, %arg3: memref<1x10xf32, #tpu.memory_space<vmem>>, %arg4: memref<2x10xf32, #tpu.memory_space<vmem>>) attributes {dimension_semantics = [#tpu.dimension_semantics<parallel>], iteration_bounds = array<i64: 1>, scalar_prefetch = 0 : i64, scratch_operands = 0 : i64, tpu.core_type = #tpu.core_type<tc>, window_params = [{transform_indices = @transform_0, window_bounds = array<i64: 2, 784>}, {pipeline_mode = #tpu.pipeline_mode<synchronous>, transform_indices = @transform_1, window_bounds = array<i64: 784, 10>}, {pipeline_mode = #tpu.pipeline_mode<synchronous>, transform_indices = @transform_2, window_bounds = array<i64: 1, 10>}, {transform_indices = @transform_3, window_bounds = array<i64: 2, 10>}]} {
    %c0 = arith.constant 0 : index
    %c0_0 = arith.constant 0 : index
    %0 = vector.load %arg1[%c0, %c0_0] : memref<2x784xf32, #tpu.memory_space<vmem>>, vector<2x784xf32>
    %c0_1 = arith.constant 0 : index
    %c0_2 = arith.constant 0 : index
    %1 = vector.load %arg2[%c0_1, %c0_2] : memref<784x10xf32, #tpu.memory_space<vmem>>, vector<784x10xf32>
    %cst = arith.constant dense<0.000000e+00> : vector<2x10xf32>
    %2 = tpu.matmul %0, %1, %cst {dimension_numbers = #tpu.dot_dimension_numbers<[1], [0], [0], [1], [0, 0, 1, 1], [], []>} : vector<2x784xf32>, vector<784x10xf32>, vector<2x10xf32> -> vector<2x10xf32>
    %c0_3 = arith.constant 0 : index
    %c0_4 = arith.constant 0 : index
    %3 = vector.load %arg3[%c0_3, %c0_4] : memref<1x10xf32, #tpu.memory_space<vmem>>, vector<1x10xf32>
    %4 = vector.broadcast %3 : vector<1x10xf32> to vector<2x10xf32>
    %5 = arith.addf %2, %4 : vector<2x10xf32>
    %c0_5 = arith.constant 0 : index
    %c0_6 = arith.constant 0 : index
    %6 = vector.load %arg4[%c0_5, %c0_6] : memref<2x10xf32, #tpu.memory_space<vmem>>, vector<2x10xf32>
    tpu.vector_store %arg4[%c0_5, %c0_6], %5 {strides = array<i32>} : memref<2x10xf32, #tpu.memory_space<vmem>>, vector<2x10xf32>,
    return
  }
  func.func @transform_0(%arg0: i32) -> (i32, i32) {
    %c0_i32 = arith.constant 0 : i32
    %c0_i32_0 = arith.constant 0 : i32
    return %arg0, %c0_i32 : i32, i32
  }
  func.func @transform_1(%arg0: i32) -> (i32, i32) {
    %c0_i32 = arith.constant 0 : i32
    %c0_i32_0 = arith.constant 0 : i32
    %c0_i32_1 = arith.constant 0 : i32
    return %c0_i32, %c0_i32_0 : i32, i32
  }
  func.func @transform_2(%arg0: i32) -> (i32, i32) {
    %c0_i32 = arith.constant 0 : i32
    %c0_i32_0 = arith.constant 0 : i32
    %c0_i32_1 = arith.constant 0 : i32
    return %c0_i32, %c0_i32_0 : i32, i32
  }
  func.func @transform_3(%arg0: i32) -> (i32, i32) {
    %c0_i32 = arith.constant 0 : i32
    %c0_i32_0 = arith.constant 0 : i32
    return %arg0, %c0_i32 : i32, i32
  }
}

</mosaic_0001>

<llo_original>
// kernel: cnn_forward.3
$region0: #{cnn_forward.3}
  #allocation0 [shape = 'u32[]', space=smem, size = 0x4, offset = 0x4, fixed_abs, tag = 'smem constant byte address 0x4 - core index']
  #allocation1 [shape = 'u32[72,128]{1,0:T(1,128)}', space=vmem, size = 0x9000, scoped, tag = 'internal scratch']
  %s0 = inlined_call_operand.vmem [shape: f32[4,9,392], index: 0, kind: input, shape index: {}]
  %s1 = inlined_call_operand.vmem [shape: f32[8,9], index: 1, kind: input, shape index: {}]
  %s2 = inlined_call_operand.vmem [shape: f32[8,1], index: 2, kind: input, shape index: {}]
  %s3 = inlined_call_operand.vmem [shape: f32[8,392], index: 3, kind: output, shape index: {}]
  %s4 = sld [smem:[#allocation0]]
  $region22: #{cnn_forward.3} parent=0
    _
  %s6 = ssub.s32 1, %s4
  %s7 = scalar_select 0, %s6, %s4
  // Predicated region
  $region2: #{cnn_forward.3} parent=0 // pred_check
    _
  $region3: #{cnn_forward.3} parent=0 // pred_check_branch
    %9 = sbr.rel (0) target = $region5
  $region4: #{cnn_forward.3} parent=0 // pred_region
    _
  $region5: #{cnn_forward.3} parent=0 // pred_fallthru
    _
  // Predicated region
  $region6: #{cnn_forward.3} parent=0 // pred_check
    _
  $region7: #{cnn_forward.3} parent=0 // pred_check_branch
    %11 = sbr.rel (0) target = $region9
  $region8: #{cnn_forward.3} parent=0 // pred_region
    _
  $region9: #{cnn_forward.3} parent=0 // pred_fallthru
    _
  // Predicated region
  $region10: #{cnn_forward.3} parent=0 // pred_check
    _
  $region11: #{cnn_forward.3} parent=0 // pred_check_branch
    %13 = sbr.rel (0) target = $region13
  $region12: #{cnn_forward.3} parent=0 // pred_region
    _
  $region13: #{cnn_forward.3} parent=0 // pred_fallthru
    _
  %v14 = vld [vmem:[%s1] sm:$0xff]
  %v15 = vld [vmem:[%s0] sm:$0xff]
  %v16 = vld [vmem:[%s0 + $0x8] sm:$0xff]
  %v17 = vld [vmem:[%s0 + $0x10] sm:$0xff]
  %v18 = vld [vmem:[%s0 + $0x18] sm:$0xff]
  %v19 = vld [vmem:[%s0 + $0x20] sm:$0x1]
  %v20 = vld [vmem:[%s0 + $0x28] sm:$0x1]
  %v21 = vld [vmem:[%s0 + $0x30] sm:$0x1]
  %v22 = vld [vmem:[%s0 + $0x38] sm:$0x1]
  %vm23 = vcmask 72704
  %v25 = vsel %vm23, %v14, 0
  %vm27 = vcmask 1040384
  %v29 = vsel %vm27, %v19, 0
  %v32 = vsel %vm27, %v20, 0
  %v35 = vsel %vm27, %v21, 0
  %v38 = vsel %vm27, %v22, 0
  %40 = vmatpush.msra.mxu0 0.0
  %41 = vmatpush.msra.mxu0 0.0
  %42 = vmatpush.msra.mxu0 0.0
  %43 = vmatpush.msra.mxu0 0.0
  %44 = vmatpush.msra.mxu0 0.0
  %45 = vmatpush.msra.mxu0 0.0
  %46 = vmatpush.msra.mxu0 0.0
  %47 = vmatpush.msra.mxu0 0.0
  %48 = vmatpush.msra.mxu0 0.0
  %49 = vmatpush.msra.mxu0 0.0
  %50 = vmatpush.msra.mxu0 0.0
  %51 = vmatpush.msra.mxu0 0.0
  %52 = vmatpush.msra.mxu0 0.0
  %53 = vmatpush.msra.mxu0 0.0
  %54 = vmatpush.msra.mxu0 %v29
  %55 = vmatpush.msra.mxu0 %v15
  %56 = vmatmul.f32.gmra.mxu0 %v25
  %v57 = vpop.f32.mrf.mxu0
  %v58 = vadd.f32 0.0, %v57
  %59 = vdwg.mxu0
  %60 = vmatpush.msra.mxu0 0.0
  %61 = vmatpush.msra.mxu0 0.0
  %62 = vmatpush.msra.mxu0 0.0
  %63 = vmatpush.msra.mxu0 0.0
  %64 = vmatpush.msra.mxu0 0.0
  %65 = vmatpush.msra.mxu0 0.0
  %66 = vmatpush.msra.mxu0 0.0
  %67 = vmatpush.msra.mxu0 0.0
  %68 = vmatpush.msra.mxu0 0.0
  %69 = vmatpush.msra.mxu0 0.0
  %70 = vmatpush.msra.mxu0 0.0
  %71 = vmatpush.msra.mxu0 0.0
  %72 = vmatpush.msra.mxu0 0.0
  %73 = vmatpush.msra.mxu0 0.0
  %74 = vmatpush.msra.mxu0 %v32
  %75 = vmatpush.msra.mxu0 %v16
  %76 = vmatmul.f32.gmra.mxu0 %v25
  %v77 = vpop.f32.mrf.mxu0
  %v78 = vadd.f32 0.0, %v77
  %79 = vdwg.mxu0
  %80 = vmatpush.msra.mxu0 0.0
  %81 = vmatpush.msra.mxu0 0.0
  %82 = vmatpush.msra.mxu0 0.0
  %83 = vmatpush.msra.mxu0 0.0
  %84 = vmatpush.msra.mxu0 0.0
  %85 = vmatpush.msra.mxu0 0.0
  %86 = vmatpush.msra.mxu0 0.0
  %87 = vmatpush.msra.mxu0 0.0
  %88 = vmatpush.msra.mxu0 0.0
  %89 = vmatpush.msra.mxu0 0.0
  %90 = vmatpush.msra.mxu0 0.0
  %91 = vmatpush.msra.mxu0 0.0
  %92 = vmatpush.msra.mxu0 0.0
  %93 = vmatpush.msra.mxu0 0.0
  %94 = vmatpush.msra.mxu0 %v35
  %95 = vmatpush.msra.mxu0 %v17
  %96 = vmatmul.f32.gmra.mxu0 %v25
  %v97 = vpop.f32.mrf.mxu0
  %v98 = vadd.f32 0.0, %v97
  %99 = vdwg.mxu0
  %100 = vmatpush.msra.mxu0 0.0
  %101 = vmatpush.msra.mxu0 0.0
  %102 = vmatpush.msra.mxu0 0.0
  %103 = vmatpush.msra.mxu0 0.0
  %104 = vmatpush.msra.mxu0 0.0
  %105 = vmatpush.msra.mxu0 0.0
  %106 = vmatpush.msra.mxu0 0.0
  %107 = vmatpush.msra.mxu0 0.0
  %108 = vmatpush.msra.mxu0 0.0
  %109 = vmatpush.msra.mxu0 0.0
  %110 = vmatpush.msra.mxu0 0.0
  %111 = vmatpush.msra.mxu0 0.0
  %112 = vmatpush.msra.mxu0 0.0
  %113 = vmatpush.msra.mxu0 0.0
  %114 = vmatpush.msra.mxu0 %v38
  %115 = vmatpush.msra.mxu0 %v18
  %116 = vmatmul.f32.gmra.mxu0 %v25
  %v117 = vpop.f32.mrf.mxu0
  %v118 = vadd.f32 0.0, %v117
  %119 = vdwg.mxu0
  %s120 = scalar_lea.vmem %s0, 64
  %v121 = vld [vmem:[%s120] sm:$0xff]
  %v122 = vld [vmem:[%s120 + $0x8] sm:$0xff]
  %v123 = vld [vmem:[%s120 + $0x10] sm:$0xff]
  %v124 = vld [vmem:[%s120 + $0x18] sm:$0xff]
  %v125 = vld [vmem:[%s120 + $0x20] sm:$0x1]
  %v126 = vld [vmem:[%s120 + $0x28] sm:$0x1]
  %v127 = vld [vmem:[%s120 + $0x30] sm:$0x1]
  %v128 = vld [vmem:[%s120 + $0x38] sm:$0x1]
  %v130 = vsel %vm27, %v125, 0
  %v133 = vsel %vm27, %v126, 0
  %v136 = vsel %vm27, %v127, 0
  %v139 = vsel %vm27, %v128, 0
  %141 = vmatpush.msra.mxu0 0.0
  %142 = vmatpush.msra.mxu0 0.0
  %143 = vmatpush.msra.mxu0 0.0
  %144 = vmatpush.msra.mxu0 0.0
  %145 = vmatpush.msra.mxu0 0.0
  %146 = vmatpush.msra.mxu0 0.0
  %147 = vmatpush.msra.mxu0 0.0
  %148 = vmatpush.msra.mxu0 0.0
  %149 = vmatpush.msra.mxu0 0.0
  %150 = vmatpush.msra.mxu0 0.0
  %151 = vmatpush.msra.mxu0 0.0
  %152 = vmatpush.msra.mxu0 0.0
  %153 = vmatpush.msra.mxu0 0.0
  %154 = vmatpush.msra.mxu0 0.0
  %155 = vmatpush.msra.mxu0 %v130
  %156 = vmatpush.msra.mxu0 %v121
  %157 = vmatmul.f32.gmra.mxu0 %v25
  %v158 = vpop.f32.mrf.mxu0
  %v159 = vadd.f32 0.0, %v158
  %160 = vdwg.mxu0
  %161 = vmatpush.msra.mxu0 0.0
  %162 = vmatpush.msra.mxu0 0.0
  %163 = vmatpush.msra.mxu0 0.0
  %164 = vmatpush.msra.mxu0 0.0
  %165 = vmatpush.msra.mxu0 0.0
  %166 = vmatpush.msra.mxu0 0.0
  %167 = vmatpush.msra.mxu0 0.0
  %168 = vmatpush.msra.mxu0 0.0
  %169 = vmatpush.msra.mxu0 0.0
  %170 = vmatpush.msra.mxu0 0.0
  %171 = vmatpush.msra.mxu0 0.0
  %172 = vmatpush.msra.mxu0 0.0
  %173 = vmatpush.msra.mxu0 0.0
  %174 = vmatpush.msra.mxu0 0.0
  %175 = vmatpush.msra.mxu0 %v133
  %176 = vmatpush.msra.mxu0 %v122
  %177 = vmatmul.f32.gmra.mxu0 %v25
  %v178 = vpop.f32.mrf.mxu0
  %v179 = vadd.f32 0.0, %v178
  %180 = vdwg.mxu0
  %181 = vmatpush.msra.mxu0 0.0
  %182 = vmatpush.msra.mxu0 0.0
  %183 = vmatpush.msra.mxu0 0.0
  %184 = vmatpush.msra.mxu0 0.0
  %185 = vmatpush.msra.mxu0 0.0
  %186 = vmatpush.msra.mxu0 0.0
  %187 = vmatpush.msra.mxu0 0.0
  %188 = vmatpush.msra.mxu0 0.0
  %189 = vmatpush.msra.mxu0 0.0
  %190 = vmatpush.msra.mxu0 0.0
  %191 = vmatpush.msra.mxu0 0.0
  %192 = vmatpush.msra.mxu0 0.0
  %193 = vmatpush.msra.mxu0 0.0
  %194 = vmatpush.msra.mxu0 0.0
  %195 = vmatpush.msra.mxu0 %v136
  %196 = vmatpush.msra.mxu0 %v123
  %197 = vmatmul.f32.gmra.mxu0 %v25
  %v198 = vpop.f32.mrf.mxu0
  %v199 = vadd.f32 0.0, %v198
  %200 = vdwg.mxu0
  %201 = vmatpush.msra.mxu0 0.0
  %202 = vmatpush.msra.mxu0 0.0
  %203 = vmatpush.msra.mxu0 0.0
  %204 = vmatpush.msra.mxu0 0.0
  %205 = vmatpush.msra.mxu0 0.0
  %206 = vmatpush.msra.mxu0 0.0
  %207 = vmatpush.msra.mxu0 0.0
  %208 = vmatpush.msra.mxu0 0.0
  %209 = vmatpush.msra.mxu0 0.0
  %210 = vmatpush.msra.mxu0 0.0
  %211 = vmatpush.msra.mxu0 0.0
  %212 = vmatpush.msra.mxu0 0.0
  %213 = vmatpush.msra.mxu0 0.0
  %214 = vmatpush.msra.mxu0 0.0
  %215 = vmatpush.msra.mxu0 %v139
  %216 = vmatpush.msra.mxu0 %v124
  %217 = vmatmul.f32.gmra.mxu0 %v25
  %v218 = vpop.f32.mrf.mxu0
  %v219 = vadd.f32 0.0, %v218
  %220 = vdwg.mxu0
  %v221 = vmax.f32 %v58, %v159
  %v222 = vmax.f32 %v78, %v179
  %v223 = vmax.f32 %v98, %v199
  %v224 = vmax.f32 %v118, %v219
  %s225 = scalar_lea.vmem %s0, 128
  %v226 = vld [vmem:[%s225] sm:$0xff]
  %v227 = vld [vmem:[%s225 + $0x8] sm:$0xff]
  %v228 = vld [vmem:[%s225 + $0x10] sm:$0xff]
  %v229 = vld [vmem:[%s225 + $0x18] sm:$0xff]
  %v230 = vld [vmem:[%s225 + $0x20] sm:$0x1]
  %v231 = vld [vmem:[%s225 + $0x28] sm:$0x1]
  %v232 = vld [vmem:[%s225 + $0x30] sm:$0x1]
  %v233 = vld [vmem:[%s225 + $0x38] sm:$0x1]
  %v235 = vsel %vm27, %v230, 0
  %v238 = vsel %vm27, %v231, 0
  %v241 = vsel %vm27, %v232, 0
  %v244 = vsel %vm27, %v233, 0
  %246 = vmatpush.msra.mxu0 0.0
  %247 = vmatpush.msra.mxu0 0.0
  %248 = vmatpush.msra.mxu0 0.0
  %249 = vmatpush.msra.mxu0 0.0
  %250 = vmatpush.msra.mxu0 0.0
  %251 = vmatpush.msra.mxu0 0.0
  %252 = vmatpush.msra.mxu0 0.0
  %253 = vmatpush.msra.mxu0 0.0
  %254 = vmatpush.msra.mxu0 0.0
  %255 = vmatpush.msra.mxu0 0.0
  %256 = vmatpush.msra.mxu0 0.0
  %257 = vmatpush.msra.mxu0 0.0
  %258 = vmatpush.msra.mxu0 0.0
  %259 = vmatpush.msra.mxu0 0.0
  %260 = vmatpush.msra.mxu0 %v235
  %261 = vmatpush.msra.mxu0 %v226
  %262 = vmatmul.f32.gmra.mxu0 %v25
  %v263 = vpop.f32.mrf.mxu0
  %v264 = vadd.f32 0.0, %v263
  %265 = vdwg.mxu0
  %266 = vmatpush.msra.mxu0 0.0
  %267 = vmatpush.msra.mxu0 0.0
  %268 = vmatpush.msra.mxu0 0.0
  %269 = vmatpush.msra.mxu0 0.0
  %270 = vmatpush.msra.mxu0 0.0
  %271 = vmatpush.msra.mxu0 0.0
  %272 = vmatpush.msra.mxu0 0.0
  %273 = vmatpush.msra.mxu0 0.0
  %274 = vmatpush.msra.mxu0 0.0
  %275 = vmatpush.msra.mxu0 0.0
  %276 = vmatpush.msra.mxu0 0.0
  %277 = vmatpush.msra.mxu0 0.0
  %278 = vmatpush.msra.mxu0 0.0
  %279 = vmatpush.msra.mxu0 0.0
  %280 = vmatpush.msra.mxu0 %v238
  %281 = vmatpush.msra.mxu0 %v227
  %282 = vmatmul.f32.gmra.mxu0 %v25
  %v283 = vpop.f32.mrf.mxu0
  %v284 = vadd.f32 0.0, %v283
  %285 = vdwg.mxu0
  %286 = vmatpush.msra.mxu0 0.0
  %287 = vmatpush.msra.mxu0 0.0
  %288 = vmatpush.msra.mxu0 0.0
  %289 = vmatpush.msra.mxu0 0.0
  %290 = vmatpush.msra.mxu0 0.0
  %291 = vmatpush.msra.mxu0 0.0
  %292 = vmatpush.msra.mxu0 0.0
  %293 = vmatpush.msra.mxu0 0.0
  %294 = vmatpush.msra.mxu0 0.0
  %295 = vmatpush.msra.mxu0 0.0
  %296 = vmatpush.msra.mxu0 0.0
  %297 = vmatpush.msra.mxu0 0.0
  %298 = vmatpush.msra.mxu0 0.0
  %299 = vmatpush.msra.mxu0 0.0
  %300 = vmatpush.msra.mxu0 %v241
  %301 = vmatpush.msra.mxu0 %v228
  %302 = vmatmul.f32.gmra.mxu0 %v25
  %v303 = vpop.f32.mrf.mxu0
  %v304 = vadd.f32 0.0, %v303
  %305 = vdwg.mxu0
  %306 = vmatpush.msra.mxu0 0.0
  %307 = vmatpush.msra.mxu0 0.0
  %308 = vmatpush.msra.mxu0 0.0
  %309 = vmatpush.msra.mxu0 0.0
  %310 = vmatpush.msra.mxu0 0.0
  %311 = vmatpush.msra.mxu0 0.0
  %312 = vmatpush.msra.mxu0 0.0
  %313 = vmatpush.msra.mxu0 0.0
  %314 = vmatpush.msra.mxu0 0.0
  %315 = vmatpush.msra.mxu0 0.0
  %316 = vmatpush.msra.mxu0 0.0
  %317 = vmatpush.msra.mxu0 0.0
  %318 = vmatpush.msra.mxu0 0.0
  %319 = vmatpush.msra.mxu0 0.0
  %320 = vmatpush.msra.mxu0 %v244
  %321 = vmatpush.msra.mxu0 %v229
  %322 = vmatmul.f32.gmra.mxu0 %v25
  %v323 = vpop.f32.mrf.mxu0
  %v324 = vadd.f32 0.0, %v323
  %325 = vdwg.mxu0
  %s326 = scalar_lea.vmem %s0, 192
  %v327 = vld [vmem:[%s326] sm:$0xff]
  %v328 = vld [vmem:[%s326 + $0x8] sm:$0xff]
  %v329 = vld [vmem:[%s326 + $0x10] sm:$0xff]
  %v330 = vld [vmem:[%s326 + $0x18] sm:$0xff]
  %v331 = vld [vmem:[%s326 + $0x20] sm:$0x1]
  %v332 = vld [vmem:[%s326 + $0x28] sm:$0x1]
  %v333 = vld [vmem:[%s326 + $0x30] sm:$0x1]
  %v334 = vld [vmem:[%s326 + $0x38] sm:$0x1]
  %v336 = vsel %vm27, %v331, 0
  %v339 = vsel %vm27, %v332, 0
  %v342 = vsel %vm27, %v333, 0
  %v345 = vsel %vm27, %v334, 0
  %347 = vmatpush.msra.mxu0 0.0
  %348 = vmatpush.msra.mxu0 0.0
  %349 = vmatpush.msra.mxu0 0.0
  %350 = vmatpush.msra.mxu0 0.0
  %351 = vmatpush.msra.mxu0 0.0
  %352 = vmatpush.msra.mxu0 0.0
  %353 = vmatpush.msra.mxu0 0.0
  %354 = vmatpush.msra.mxu0 0.0
  %355 = vmatpush.msra.mxu0 0.0
  %356 = vmatpush.msra.mxu0 0.0
  %357 = vmatpush.msra.mxu0 0.0
  %358 = vmatpush.msra.mxu0 0.0
  %359 = vmatpush.msra.mxu0 0.0
  %360 = vmatpush.msra.mxu0 0.0
  %361 = vmatpush.msra.mxu0 %v336
  %362 = vmatpush.msra.mxu0 %v327
  %363 = vmatmul.f32.gmra.mxu0 %v25
  %v364 = vpop.f32.mrf.mxu0
  %v365 = vadd.f32 0.0, %v364
  %366 = vdwg.mxu0
  %367 = vmatpush.msra.mxu0 0.0
  %368 = vmatpush.msra.mxu0 0.0
  %369 = vmatpush.msra.mxu0 0.0
  %370 = vmatpush.msra.mxu0 0.0
  %371 = vmatpush.msra.mxu0 0.0
  %372 = vmatpush.msra.mxu0 0.0
  %373 = vmatpush.msra.mxu0 0.0
  %374 = vmatpush.msra.mxu0 0.0
  %375 = vmatpush.msra.mxu0 0.0
  %376 = vmatpush.msra.mxu0 0.0
  %377 = vmatpush.msra.mxu0 0.0
  %378 = vmatpush.msra.mxu0 0.0
  %379 = vmatpush.msra.mxu0 0.0
  %380 = vmatpush.msra.mxu0 0.0
  %381 = vmatpush.msra.mxu0 %v339
  %382 = vmatpush.msra.mxu0 %v328
  %383 = vmatmul.f32.gmra.mxu0 %v25
  %v384 = vpop.f32.mrf.mxu0
  %v385 = vadd.f32 0.0, %v384
  %386 = vdwg.mxu0
  %387 = vmatpush.msra.mxu0 0.0
  %388 = vmatpush.msra.mxu0 0.0
  %389 = vmatpush.msra.mxu0 0.0
  %390 = vmatpush.msra.mxu0 0.0
  %391 = vmatpush.msra.mxu0 0.0
  %392 = vmatpush.msra.mxu0 0.0
  %393 = vmatpush.msra.mxu0 0.0
  %394 = vmatpush.msra.mxu0 0.0
  %395 = vmatpush.msra.mxu0 0.0
  %396 = vmatpush.msra.mxu0 0.0
  %397 = vmatpush.msra.mxu0 0.0
  %398 = vmatpush.msra.mxu0 0.0
  %399 = vmatpush.msra.mxu0 0.0
  %400 = vmatpush.msra.mxu0 0.0
  %401 = vmatpush.msra.mxu0 %v342
  %402 = vmatpush.msra.mxu0 %v329
  %403 = vmatmul.f32.gmra.mxu0 %v25
  %v404 = vpop.f32.mrf.mxu0
  %v405 = vadd.f32 0.0, %v404
  %406 = vdwg.mxu0
  %407 = vmatpush.msra.mxu0 0.0
  %408 = vmatpush.msra.mxu0 0.0
  %409 = vmatpush.msra.mxu0 0.0
  %410 = vmatpush.msra.mxu0 0.0
  %411 = vmatpush.msra.mxu0 0.0
  %412 = vmatpush.msra.mxu0 0.0
  %413 = vmatpush.msra.mxu0 0.0
  %414 = vmatpush.msra.mxu0 0.0
  %415 = vmatpush.msra.mxu0 0.0
  %416 = vmatpush.msra.mxu0 0.0
  %417 = vmatpush.msra.mxu0 0.0
  %418 = vmatpush.msra.mxu0 0.0
  %419 = vmatpush.msra.mxu0 0.0
  %420 = vmatpush.msra.mxu0 0.0
  %421 = vmatpush.msra.mxu0 %v345
  %422 = vmatpush.msra.mxu0 %v330
  %423 = vmatmul.f32.gmra.mxu0 %v25
  %v424 = vpop.f32.mrf.mxu0
  %v425 = vadd.f32 0.0, %v424
  %426 = vdwg.mxu0
  %v427 = vmax.f32 %v264, %v365
  %v428 = vmax.f32 %v284, %v385
  %v429 = vmax.f32 %v304, %v405
  %v430 = vmax.f32 %v324, %v425
  %v431 = vmax.f32 %v221, %v427
  %v432 = vmax.f32 %v222, %v428
  %v433 = vmax.f32 %v223, %v429
  %v434 = vmax.f32 %v224, %v430
  %v435 = vld [vmem:[%s2] sm:$0xff]
  %437 = vset.pattern.permute.xlu0 0
  %438 = vperm.xlu0 %437, %v435
  %v439 = vpop.permute.xlu0 %438
  %v441 = vadd.f32 %v431, %v439
  %v442 = vadd.f32 %v432, %v439
  %v443 = vadd.f32 %v433, %v439
  %v444 = vadd.f32 %v434, %v439
  %v445 = vmax.f32 %v441, 0.0
  %v446 = vmax.f32 %v442, 0.0
  %v447 = vmax.f32 %v443, 0.0
  %v448 = vmax.f32 %v444, 0.0
  %449 = vst [vmem:[%s3] sm:$0xff] %v445
  %450 = vst [vmem:[%s3 + $0x8] sm:$0xff] %v446
  %451 = vst [vmem:[%s3 + $0x10] sm:$0xff] %v447
  %vm452 = vcmask 64512
  %453 = vst.msk [vmem:[%s3 + $0x18] sm:$0xff] %vm452, %v448
  // Predicated region
  $region14: #{cnn_forward.3} parent=0 // pred_check
    _
  $region15: #{cnn_forward.3} parent=0 // pred_check_branch
    %455 = sbr.rel (0) target = $region17
  $region16: #{cnn_forward.3} parent=0 // pred_region
    _
  $region17: #{cnn_forward.3} parent=0 // pred_fallthru
    _
  // Predicated region
  $region18: #{cnn_forward.3} parent=0 // pred_check
    _
  $region19: #{cnn_forward.3} parent=0 // pred_check_branch
    %457 = sbr.rel (0) target = $region21
  $region20: #{cnn_forward.3} parent=0 // pred_region
    _
  $region21: #{cnn_forward.3} parent=0 // pred_fallthru
    _

// kernel: cnn_forward.4
$region0: #{cnn_forward.4}
  #allocation0 [shape = 'u32[]', space=smem, size = 0x4, offset = 0x4, fixed_abs, tag = 'smem constant byte address 0x4 - core index']
  #allocation1 [shape = 'u32[72,128]{1,0:T(1,128)}', space=vmem, size = 0x9000, scoped, tag = 'internal scratch']
  %s0 = inlined_call_operand.vmem [shape: f32[4,72,98], index: 0, kind: input, shape index: {}]
  %s1 = inlined_call_operand.vmem [shape: f32[16,72], index: 1, kind: input, shape index: {}]
  %s2 = inlined_call_operand.vmem [shape: f32[16,1], index: 2, kind: input, shape index: {}]
  %s3 = inlined_call_operand.vmem [shape: f32[16,98], index: 3, kind: output, shape index: {}]
  %s4 = sld [smem:[#allocation0]]
  $region22: #{cnn_forward.4} parent=0
    _
  %s6 = ssub.s32 1, %s4
  %s7 = scalar_select 0, %s6, %s4
  // Predicated region
  $region2: #{cnn_forward.4} parent=0 // pred_check
    _
  $region3: #{cnn_forward.4} parent=0 // pred_check_branch
    %9 = sbr.rel (0) target = $region5
  $region4: #{cnn_forward.4} parent=0 // pred_region
    _
  $region5: #{cnn_forward.4} parent=0 // pred_fallthru
    _
  // Predicated region
  $region6: #{cnn_forward.4} parent=0 // pred_check
    _
  $region7: #{cnn_forward.4} parent=0 // pred_check_branch
    %11 = sbr.rel (0) target = $region9
  $region8: #{cnn_forward.4} parent=0 // pred_region
    _
  $region9: #{cnn_forward.4} parent=0 // pred_fallthru
    _
  // Predicated region
  $region10: #{cnn_forward.4} parent=0 // pred_check
    _
  $region11: #{cnn_forward.4} parent=0 // pred_check_branch
    %13 = sbr.rel (0) target = $region13
  $region12: #{cnn_forward.4} parent=0 // pred_region
    _
  $region13: #{cnn_forward.4} parent=0 // pred_fallthru
    _
  %v14 = vld [vmem:[%s1] sm:$0xff]
  %v15 = vld [vmem:[%s1 + $0x8] sm:$0xff]
  %v16 = vld [vmem:[%s0] sm:$0xff]
  %v17 = vld [vmem:[%s0 + $0x8] sm:$0xff]
  %v18 = vld [vmem:[%s0 + $0x10] sm:$0xff]
  %v19 = vld [vmem:[%s0 + $0x18] sm:$0xff]
  %v20 = vld [vmem:[%s0 + $0x20] sm:$0xff]
  %v21 = vld [vmem:[%s0 + $0x28] sm:$0xff]
  %v22 = vld [vmem:[%s0 + $0x30] sm:$0xff]
  %v23 = vld [vmem:[%s0 + $0x38] sm:$0xff]
  %v24 = vld [vmem:[%s0 + $0x40] sm:$0xff]
  %vm25 = vcmask 588800
  %v27 = vsel %vm25, %v14, 0
  %v30 = vsel %vm25, %v15, 0
  %32 = vmatpush.msra.mxu0 0.0
  %33 = vmatpush.msra.mxu0 0.0
  %34 = vmatpush.msra.mxu0 0.0
  %35 = vmatpush.msra.mxu0 0.0
  %36 = vmatpush.msra.mxu0 0.0
  %37 = vmatpush.msra.mxu0 0.0
  %38 = vmatpush.msra.mxu0 0.0
  %39 = vmatpush.msra.mxu0 %v24
  %40 = vmatpush.msra.mxu0 %v23
  %41 = vmatpush.msra.mxu0 %v22
  %42 = vmatpush.msra.mxu0 %v21
  %43 = vmatpush.msra.mxu0 %v20
  %44 = vmatpush.msra.mxu0 %v19
  %45 = vmatpush.msra.mxu0 %v18
  %46 = vmatpush.msra.mxu0 %v17
  %47 = vmatpush.msra.mxu0 %v16
  %48 = vmatmul.f32.gmra.mxu0 %v27
  %v49 = vpop.f32.mrf.mxu0
  %v50 = vadd.f32 0.0, %v49
  %51 = vmatmul.f32.gmra.mxu0 %v30
  %v52 = vpop.f32.mrf.mxu0
  %v53 = vadd.f32 0.0, %v52
  %54 = vdwg.mxu0
  %s55 = scalar_lea.vmem %s0, 72
  %v56 = vld [vmem:[%s55] sm:$0xff]
  %v57 = vld [vmem:[%s55 + $0x8] sm:$0xff]
  %v58 = vld [vmem:[%s55 + $0x10] sm:$0xff]
  %v59 = vld [vmem:[%s55 + $0x18] sm:$0xff]
  %v60 = vld [vmem:[%s55 + $0x20] sm:$0xff]
  %v61 = vld [vmem:[%s55 + $0x28] sm:$0xff]
  %v62 = vld [vmem:[%s55 + $0x30] sm:$0xff]
  %v63 = vld [vmem:[%s55 + $0x38] sm:$0xff]
  %v64 = vld [vmem:[%s55 + $0x40] sm:$0xff]
  %65 = vmatpush.msra.mxu0 0.0
  %66 = vmatpush.msra.mxu0 0.0
  %67 = vmatpush.msra.mxu0 0.0
  %68 = vmatpush.msra.mxu0 0.0
  %69 = vmatpush.msra.mxu0 0.0
  %70 = vmatpush.msra.mxu0 0.0
  %71 = vmatpush.msra.mxu0 0.0
  %72 = vmatpush.msra.mxu0 %v64
  %73 = vmatpush.msra.mxu0 %v63
  %74 = vmatpush.msra.mxu0 %v62
  %75 = vmatpush.msra.mxu0 %v61
  %76 = vmatpush.msra.mxu0 %v60
  %77 = vmatpush.msra.mxu0 %v59
  %78 = vmatpush.msra.mxu0 %v58
  %79 = vmatpush.msra.mxu0 %v57
  %80 = vmatpush.msra.mxu0 %v56
  %81 = vmatmul.f32.gmra.mxu0 %v27
  %v82 = vpop.f32.mrf.mxu0
  %v83 = vadd.f32 0.0, %v82
  %84 = vmatmul.f32.gmra.mxu0 %v30
  %v85 = vpop.f32.mrf.mxu0
  %v86 = vadd.f32 0.0, %v85
  %87 = vdwg.mxu0
  %v88 = vmax.f32 %v50, %v83
  %v89 = vmax.f32 %v53, %v86
  %s90 = scalar_lea.vmem %s0, 144
  %v91 = vld [vmem:[%s90] sm:$0xff]
  %v92 = vld [vmem:[%s90 + $0x8] sm:$0xff]
  %v93 = vld [vmem:[%s90 + $0x10] sm:$0xff]
  %v94 = vld [vmem:[%s90 + $0x18] sm:$0xff]
  %v95 = vld [vmem:[%s90 + $0x20] sm:$0xff]
  %v96 = vld [vmem:[%s90 + $0x28] sm:$0xff]
  %v97 = vld [vmem:[%s90 + $0x30] sm:$0xff]
  %v98 = vld [vmem:[%s90 + $0x38] sm:$0xff]
  %v99 = vld [vmem:[%s90 + $0x40] sm:$0xff]
  %100 = vmatpush.msra.mxu0 0.0
  %101 = vmatpush.msra.mxu0 0.0
  %102 = vmatpush.msra.mxu0 0.0
  %103 = vmatpush.msra.mxu0 0.0
  %104 = vmatpush.msra.mxu0 0.0
  %105 = vmatpush.msra.mxu0 0.0
  %106 = vmatpush.msra.mxu0 0.0
  %107 = vmatpush.msra.mxu0 %v99
  %108 = vmatpush.msra.mxu0 %v98
  %109 = vmatpush.msra.mxu0 %v97
  %110 = vmatpush.msra.mxu0 %v96
  %111 = vmatpush.msra.mxu0 %v95
  %112 = vmatpush.msra.mxu0 %v94
  %113 = vmatpush.msra.mxu0 %v93
  %114 = vmatpush.msra.mxu0 %v92
  %115 = vmatpush.msra.mxu0 %v91
  %116 = vmatmul.f32.gmra.mxu0 %v27
  %v117 = vpop.f32.mrf.mxu0
  %v118 = vadd.f32 0.0, %v117
  %119 = vmatmul.f32.gmra.mxu0 %v30
  %v120 = vpop.f32.mrf.mxu0
  %v121 = vadd.f32 0.0, %v120
  %122 = vdwg.mxu0
  %s123 = scalar_lea.vmem %s0, 216
  %v124 = vld [vmem:[%s123] sm:$0xff]
  %v125 = vld [vmem:[%s123 + $0x8] sm:$0xff]
  %v126 = vld [vmem:[%s123 + $0x10] sm:$0xff]
  %v127 = vld [vmem:[%s123 + $0x18] sm:$0xff]
  %v128 = vld [vmem:[%s123 + $0x20] sm:$0xff]
  %v129 = vld [vmem:[%s123 + $0x28] sm:$0xff]
  %v130 = vld [vmem:[%s123 + $0x30] sm:$0xff]
  %v131 = vld [vmem:[%s123 + $0x38] sm:$0xff]
  %v132 = vld [vmem:[%s123 + $0x40] sm:$0xff]
  %133 = vmatpush.msra.mxu0 0.0
  %134 = vmatpush.msra.mxu0 0.0
  %135 = vmatpush.msra.mxu0 0.0
  %136 = vmatpush.msra.mxu0 0.0
  %137 = vmatpush.msra.mxu0 0.0
  %138 = vmatpush.msra.mxu0 0.0
  %139 = vmatpush.msra.mxu0 0.0
  %140 = vmatpush.msra.mxu0 %v132
  %141 = vmatpush.msra.mxu0 %v131
  %142 = vmatpush.msra.mxu0 %v130
  %143 = vmatpush.msra.mxu0 %v129
  %144 = vmatpush.msra.mxu0 %v128
  %145 = vmatpush.msra.mxu0 %v127
  %146 = vmatpush.msra.mxu0 %v126
  %147 = vmatpush.msra.mxu0 %v125
  %148 = vmatpush.msra.mxu0 %v124
  %149 = vmatmul.f32.gmra.mxu0 %v27
  %v150 = vpop.f32.mrf.mxu0
  %v151 = vadd.f32 0.0, %v150
  %152 = vmatmul.f32.gmra.mxu0 %v30
  %v153 = vpop.f32.mrf.mxu0
  %v154 = vadd.f32 0.0, %v153
  %155 = vdwg.mxu0
  %v156 = vmax.f32 %v118, %v151
  %v157 = vmax.f32 %v121, %v154
  %v158 = vmax.f32 %v88, %v156
  %v159 = vmax.f32 %v89, %v157
  %v160 = vld [vmem:[%s2] sm:$0xff]
  %v161 = vld [vmem:[%s2 + $0x8] sm:$0xff]
  %163 = vset.pattern.permute.xlu0 0
  %164 = vperm.xlu0 %163, %v160
  %v165 = vpop.permute.xlu0 %164
  %168 = vset.pattern.permute.xlu0 0
  %169 = vperm.xlu0 %168, %v161
  %v170 = vpop.permute.xlu0 %169
  %v172 = vadd.f32 %v158, %v165
  %v173 = vadd.f32 %v159, %v170
  %v174 = vmax.f32 %v172, 0.0
  %v175 = vmax.f32 %v173, 0.0
  %vm176 = vcmask 801792
  %177 = vst.msk [vmem:[%s3] sm:$0xff] %vm176, %v174
  %178 = vst.msk [vmem:[%s3 + $0x8] sm:$0xff] %vm176, %v175
  // Predicated region
  $region14: #{cnn_forward.4} parent=0 // pred_check
    _
  $region15: #{cnn_forward.4} parent=0 // pred_check_branch
    %180 = sbr.rel (0) target = $region17
  $region16: #{cnn_forward.4} parent=0 // pred_region
    _
  $region17: #{cnn_forward.4} parent=0 // pred_fallthru
    _
  // Predicated region
  $region18: #{cnn_forward.4} parent=0 // pred_check
    _
  $region19: #{cnn_forward.4} parent=0 // pred_check_branch
    %182 = sbr.rel (0) target = $region21
  $region20: #{cnn_forward.4} parent=0 // pred_region
    _
  $region21: #{cnn_forward.4} parent=0 // pred_fallthru
    _

// kernel: cnn_forward.5
$region0: #{cnn_forward.5}
  #allocation0 [shape = 'u32[]', space=smem, size = 0x4, offset = 0x4, fixed_abs, tag = 'smem constant byte address 0x4 - core index']
  #allocation1 [shape = 'u32[72,128]{1,0:T(1,128)}', space=vmem, size = 0x9000, scoped, tag = 'internal scratch']
  %s0 = inlined_call_operand.vmem [shape: f32[2,784], index: 0, kind: input, shape index: {}]
  %s1 = inlined_call_operand.vmem [shape: f32[784,10], index: 1, kind: input, shape index: {}]
  %s2 = inlined_call_operand.vmem [shape: f32[1,10], index: 2, kind: input, shape index: {}]
  %s3 = inlined_call_operand.hbm [shape: f32[2,10], index: 3, kind: output, shape index: {}]
  %s4 = sld [smem:[#allocation0]]
  $region22: #{cnn_forward.5} parent=0
    _
  %s6 = ssub.s32 1, %s4
  %s7 = scalar_select 0, %s6, %s4
  $region1: #{cnn_forward.5} parent=0
    #allocation2 [shape = 'u8[1024]{0}', space=vmem, size = 0x400, scoped, tag = 'output window, operand 0, single buffered']
    #allocation3 [shape = 's32[1]{0}', space=sflag, size = 0x4, scoped, tag = 'scoped memory for cnn_forward.5']
    %8 = vsyncpa [#allocation3], 0
    // Predicated region
    $region2: #{cnn_forward.5} parent=1 // pred_check
      _
    $region3: #{cnn_forward.5} parent=1 // pred_check_branch
      %10 = sbr.rel (0) target = $region5
    $region4: #{cnn_forward.5} parent=1 // pred_region
      _
    $region5: #{cnn_forward.5} parent=1 // pred_fallthru
      _
    // Predicated region
    $region6: #{cnn_forward.5} parent=1 // pred_check
      _
    $region7: #{cnn_forward.5} parent=1 // pred_check_branch
      %12 = sbr.rel (0) target = $region9
    $region8: #{cnn_forward.5} parent=1 // pred_region
      _
    $region9: #{cnn_forward.5} parent=1 // pred_fallthru
      _
    // Predicated region
    $region10: #{cnn_forward.5} parent=1 // pred_check
      _
    $region11: #{cnn_forward.5} parent=1 // pred_check_branch
      %14 = sbr.rel (0) target = $region13
    $region12: #{cnn_forward.5} parent=1 // pred_region
      _
    $region13: #{cnn_forward.5} parent=1 // pred_fallthru
      _
    %v15 = vld [vmem:[%s0] sm:$0xff]
    %v16 = vld [vmem:[%s0 + $0x8] sm:$0x3f]
    %v17 = vld [vmem:[%s1] sm:$0xff]
    %v18 = vld [vmem:[%s1 + $0x8] sm:$0xff]
    %v19 = vld [vmem:[%s1 + $0x10] sm:$0xff]
    %v20 = vld [vmem:[%s1 + $0x18] sm:$0xff]
    %v21 = vld [vmem:[%s1 + $0x20] sm:$0xff]
    %v22 = vld [vmem:[%s1 + $0x28] sm:$0xff]
    %v23 = vld [vmem:[%s1 + $0x30] sm:$0xff]
    %v24 = vld [vmem:[%s1 + $0x38] sm:$0xff]
    %v25 = vld [vmem:[%s1 + $0x40] sm:$0xff]
    %v26 = vld [vmem:[%s1 + $0x48] sm:$0xff]
    %v27 = vld [vmem:[%s1 + $0x50] sm:$0xff]
    %v28 = vld [vmem:[%s1 + $0x58] sm:$0xff]
    %v29 = vld [vmem:[%s1 + $0x60] sm:$0xff]
    %v30 = vld [vmem:[%s1 + $0x68] sm:$0xff]
    %v31 = vld [vmem:[%s1 + $0x70] sm:$0xff]
    %v32 = vld [vmem:[%s1 + $0x78] sm:$0xff]
    %v33 = vld [vmem:[%s1 + $0x80] sm:$0xff]
    %v34 = vld [vmem:[%s1 + $0x88] sm:$0xff]
    %v35 = vld [vmem:[%s1 + $0x90] sm:$0xff]
    %v36 = vld [vmem:[%s1 + $0x98] sm:$0xff]
    %v37 = vld [vmem:[%s1 + $0xa0] sm:$0xff]
    %v38 = vld [vmem:[%s1 + $0xa8] sm:$0xff]
    %v39 = vld [vmem:[%s1 + $0xb0] sm:$0xff]
    %v40 = vld [vmem:[%s1 + $0xb8] sm:$0xff]
    %v41 = vld [vmem:[%s1 + $0xc0] sm:$0xff]
    %v42 = vld [vmem:[%s1 + $0xc8] sm:$0xff]
    %v43 = vld [vmem:[%s1 + $0xd0] sm:$0xff]
    %v44 = vld [vmem:[%s1 + $0xd8] sm:$0xff]
    %v45 = vld [vmem:[%s1 + $0xe0] sm:$0xff]
    %v46 = vld [vmem:[%s1 + $0xe8] sm:$0xff]
    %v47 = vld [vmem:[%s1 + $0xf0] sm:$0xff]
    %v48 = vld [vmem:[%s1 + $0xf8] sm:$0xff]
    %v49 = vld [vmem:[%s1 + $0x100] sm:$0xff]
    %v50 = vld [vmem:[%s1 + $0x108] sm:$0xff]
    %v51 = vld [vmem:[%s1 + $0x110] sm:$0xff]
    %v52 = vld [vmem:[%s1 + $0x118] sm:$0xff]
    %v53 = vld [vmem:[%s1 + $0x120] sm:$0xff]
    %v54 = vld [vmem:[%s1 + $0x128] sm:$0xff]
    %v55 = vld [vmem:[%s1 + $0x130] sm:$0xff]
    %v56 = vld [vmem:[%s1 + $0x138] sm:$0xff]
    %v57 = vld [vmem:[%s1 + $0x140] sm:$0xff]
    %v58 = vld [vmem:[%s1 + $0x148] sm:$0xff]
    %v59 = vld [vmem:[%s1 + $0x150] sm:$0xff]
    %v60 = vld [vmem:[%s1 + $0x158] sm:$0xff]
    %v61 = vld [vmem:[%s1 + $0x160] sm:$0xff]
    %v62 = vld [vmem:[%s1 + $0x168] sm:$0xff]
    %v63 = vld [vmem:[%s1 + $0x170] sm:$0xff]
    %v64 = vld [vmem:[%s1 + $0x178] sm:$0xff]
    %v65 = vld [vmem:[%s1 + $0x180] sm:$0xff]
    %v66 = vld [vmem:[%s1 + $0x188] sm:$0xff]
    %v67 = vld [vmem:[%s1 + $0x190] sm:$0xff]
    %v68 = vld [vmem:[%s1 + $0x198] sm:$0xff]
    %v69 = vld [vmem:[%s1 + $0x1a0] sm:$0xff]
    %v70 = vld [vmem:[%s1 + $0x1a8] sm:$0xff]
    %v71 = vld [vmem:[%s1 + $0x1b0] sm:$0xff]
    %v72 = vld [vmem:[%s1 + $0x1b8] sm:$0xff]
    %v73 = vld [vmem:[%s1 + $0x1c0] sm:$0xff]
    %v74 = vld [vmem:[%s1 + $0x1c8] sm:$0xff]
    %v75 = vld [vmem:[%s1 + $0x1d0] sm:$0xff]
    %v76 = vld [vmem:[%s1 + $0x1d8] sm:$0xff]
    %v77 = vld [vmem:[%s1 + $0x1e0] sm:$0xff]
    %v78 = vld [vmem:[%s1 + $0x1e8] sm:$0xff]
    %v79 = vld [vmem:[%s1 + $0x1f0] sm:$0xff]
    %v80 = vld [vmem:[%s1 + $0x1f8] sm:$0xff]
    %v81 = vld [vmem:[%s1 + $0x200] sm:$0xff]
    %v82 = vld [vmem:[%s1 + $0x208] sm:$0xff]
    %v83 = vld [vmem:[%s1 + $0x210] sm:$0xff]
    %v84 = vld [vmem:[%s1 + $0x218] sm:$0xff]
    %v85 = vld [vmem:[%s1 + $0x220] sm:$0xff]
    %v86 = vld [vmem:[%s1 + $0x228] sm:$0xff]
    %v87 = vld [vmem:[%s1 + $0x230] sm:$0xff]
    %v88 = vld [vmem:[%s1 + $0x238] sm:$0xff]
    %v89 = vld [vmem:[%s1 + $0x240] sm:$0xff]
    %v90 = vld [vmem:[%s1 + $0x248] sm:$0xff]
    %v91 = vld [vmem:[%s1 + $0x250] sm:$0xff]
    %v92 = vld [vmem:[%s1 + $0x258] sm:$0xff]
    %v93 = vld [vmem:[%s1 + $0x260] sm:$0xff]
    %v94 = vld [vmem:[%s1 + $0x268] sm:$0xff]
    %v95 = vld [vmem:[%s1 + $0x270] sm:$0xff]
    %v96 = vld [vmem:[%s1 + $0x278] sm:$0xff]
    %v97 = vld [vmem:[%s1 + $0x280] sm:$0xff]
    %v98 = vld [vmem:[%s1 + $0x288] sm:$0xff]
    %v99 = vld [vmem:[%s1 + $0x290] sm:$0xff]
    %v100 = vld [vmem:[%s1 + $0x298] sm:$0xff]
    %v101 = vld [vmem:[%s1 + $0x2a0] sm:$0xff]
    %v102 = vld [vmem:[%s1 + $0x2a8] sm:$0xff]
    %v103 = vld [vmem:[%s1 + $0x2b0] sm:$0xff]
    %v104 = vld [vmem:[%s1 + $0x2b8] sm:$0xff]
    %v105 = vld [vmem:[%s1 + $0x2c0] sm:$0xff]
    %v106 = vld [vmem:[%s1 + $0x2c8] sm:$0xff]
    %v107 = vld [vmem:[%s1 + $0x2d0] sm:$0xff]
    %v108 = vld [vmem:[%s1 + $0x2d8] sm:$0xff]
    %v109 = vld [vmem:[%s1 + $0x2e0] sm:$0xff]
    %v110 = vld [vmem:[%s1 + $0x2e8] sm:$0xff]
    %v111 = vld [vmem:[%s1 + $0x2f0] sm:$0xff]
    %v112 = vld [vmem:[%s1 + $0x2f8] sm:$0xff]
    %v113 = vld [vmem:[%s1 + $0x300] sm:$0xff]
    %v114 = vld [vmem:[%s1 + $0x308] sm:$0xff]
    %v115 = vld [vmem:[%s2] sm:$0x1]
    %v117 = vperm.slane %v115, 0
    %121 = vst [vmem:[#allocation1] ss:$4 sm:$0xff] %v15
    %s122 = scalar_lea.vmem [#allocation1], 32
    %123 = vst [vmem:[%s122] ss:$4 sm:$0xff] %v16
    %v124 = vld.sshfl [vmem:[#allocation1] sm:$0xff pattern:$0x73625140]
    %v125 = vld.sshfl [vmem:[#allocation1 + $0x8] sm:$0xff pattern:$0x73625140]
    %v126 = vld.sshfl [vmem:[#allocation1 + $0x10] sm:$0xff pattern:$0x73625140]
    %v127 = vld.sshfl [vmem:[#allocation1 + $0x18] sm:$0xff pattern:$0x73625140]
    %v128 = vld.sshfl [vmem:[#allocation1 + $0x20] sm:$0xff pattern:$0x73625140]
    %v129 = vld.sshfl [vmem:[#allocation1 + $0x28] sm:$0xff pattern:$0x73625140]
    %v130 = vld.sshfl [vmem:[#allocation1 + $0x30] sm:$0xff pattern:$0x73625140]
    %vm137 = vcmask 130048
    %v138 = vsel %vm137, %v130, 0
    %140 = vmatpush.msra.mxu0 %v32
    %141 = vmatpush.msra.mxu0 %v31
    %142 = vmatpush.msra.mxu0 %v30
    %143 = vmatpush.msra.mxu0 %v29
    %144 = vmatpush.msra.mxu0 %v28
    %145 = vmatpush.msra.mxu0 %v27
    %146 = vmatpush.msra.mxu0 %v26
    %147 = vmatpush.msra.mxu0 %v25
    %148 = vmatpush.msra.mxu0 %v24
    %149 = vmatpush.msra.mxu0 %v23
    %150 = vmatpush.msra.mxu0 %v22
    %151 = vmatpush.msra.mxu0 %v21
    %152 = vmatpush.msra.mxu0 %v20
    %153 = vmatpush.msra.mxu0 %v19
    %154 = vmatpush.msra.mxu0 %v18
    %155 = vmatpush.msra.mxu0 %v17
    %156 = vmatmul.f32.gmra.mxu0 %v124
    %v157 = vpop.f32.mrf.mxu0
    %v158 = vadd.f32 %v117, %v157
    %159 = vdwg.mxu0
    %160 = vmatpush.msra.mxu0 %v48
    %161 = vmatpush.msra.mxu0 %v47
    %162 = vmatpush.msra.mxu0 %v46
    %163 = vmatpush.msra.mxu0 %v45
    %164 = vmatpush.msra.mxu0 %v44
    %165 = vmatpush.msra.mxu0 %v43
    %166 = vmatpush.msra.mxu0 %v42
    %167 = vmatpush.msra.mxu0 %v41
    %168 = vmatpush.msra.mxu0 %v40
    %169 = vmatpush.msra.mxu0 %v39
    %170 = vmatpush.msra.mxu0 %v38
    %171 = vmatpush.msra.mxu0 %v37
    %172 = vmatpush.msra.mxu0 %v36
    %173 = vmatpush.msra.mxu0 %v35
    %174 = vmatpush.msra.mxu0 %v34
    %175 = vmatpush.msra.mxu0 %v33
    %176 = vmatmul.f32.gmra.mxu0 %v125
    %v177 = vpop.f32.mrf.mxu0
    %v178 = vadd.f32 %v158, %v177
    %179 = vdwg.mxu0
    %180 = vmatpush.msra.mxu0 %v64
    %181 = vmatpush.msra.mxu0 %v63
    %182 = vmatpush.msra.mxu0 %v62
    %183 = vmatpush.msra.mxu0 %v61
    %184 = vmatpush.msra.mxu0 %v60
    %185 = vmatpush.msra.mxu0 %v59
    %186 = vmatpush.msra.mxu0 %v58
    %187 = vmatpush.msra.mxu0 %v57
    %188 = vmatpush.msra.mxu0 %v56
    %189 = vmatpush.msra.mxu0 %v55
    %190 = vmatpush.msra.mxu0 %v54
    %191 = vmatpush.msra.mxu0 %v53
    %192 = vmatpush.msra.mxu0 %v52
    %193 = vmatpush.msra.mxu0 %v51
    %194 = vmatpush.msra.mxu0 %v50
    %195 = vmatpush.msra.mxu0 %v49
    %196 = vmatmul.f32.gmra.mxu0 %v126
    %v197 = vpop.f32.mrf.mxu0
    %v198 = vadd.f32 %v178, %v197
    %199 = vdwg.mxu0
    %200 = vmatpush.msra.mxu0 %v80
    %201 = vmatpush.msra.mxu0 %v79
    %202 = vmatpush.msra.mxu0 %v78
    %203 = vmatpush.msra.mxu0 %v77
    %204 = vmatpush.msra.mxu0 %v76
    %205 = vmatpush.msra.mxu0 %v75
    %206 = vmatpush.msra.mxu0 %v74
    %207 = vmatpush.msra.mxu0 %v73
    %208 = vmatpush.msra.mxu0 %v72
    %209 = vmatpush.msra.mxu0 %v71
    %210 = vmatpush.msra.mxu0 %v70
    %211 = vmatpush.msra.mxu0 %v69
    %212 = vmatpush.msra.mxu0 %v68
    %213 = vmatpush.msra.mxu0 %v67
    %214 = vmatpush.msra.mxu0 %v66
    %215 = vmatpush.msra.mxu0 %v65
    %216 = vmatmul.f32.gmra.mxu0 %v127
    %v217 = vpop.f32.mrf.mxu0
    %v218 = vadd.f32 %v198, %v217
    %219 = vdwg.mxu0
    %220 = vmatpush.msra.mxu0 %v96
    %221 = vmatpush.msra.mxu0 %v95
    %222 = vmatpush.msra.mxu0 %v94
    %223 = vmatpush.msra.mxu0 %v93
    %224 = vmatpush.msra.mxu0 %v92
    %225 = vmatpush.msra.mxu0 %v91
    %226 = vmatpush.msra.mxu0 %v90
    %227 = vmatpush.msra.mxu0 %v89
    %228 = vmatpush.msra.mxu0 %v88
    %229 = vmatpush.msra.mxu0 %v87
    %230 = vmatpush.msra.mxu0 %v86
    %231 = vmatpush.msra.mxu0 %v85
    %232 = vmatpush.msra.mxu0 %v84
    %233 = vmatpush.msra.mxu0 %v83
    %234 = vmatpush.msra.mxu0 %v82
    %235 = vmatpush.msra.mxu0 %v81
    %236 = vmatmul.f32.gmra.mxu0 %v128
    %v237 = vpop.f32.mrf.mxu0
    %v238 = vadd.f32 %v218, %v237
    %239 = vdwg.mxu0
    %240 = vmatpush.msra.mxu0 %v112
    %241 = vmatpush.msra.mxu0 %v111
    %242 = vmatpush.msra.mxu0 %v110
    %243 = vmatpush.msra.mxu0 %v109
    %244 = vmatpush.msra.mxu0 %v108
    %245 = vmatpush.msra.mxu0 %v107
    %246 = vmatpush.msra.mxu0 %v106
    %247 = vmatpush.msra.mxu0 %v105
    %248 = vmatpush.msra.mxu0 %v104
    %249 = vmatpush.msra.mxu0 %v103
    %250 = vmatpush.msra.mxu0 %v102
    %251 = vmatpush.msra.mxu0 %v101
    %252 = vmatpush.msra.mxu0 %v100
    %253 = vmatpush.msra.mxu0 %v99
    %254 = vmatpush.msra.mxu0 %v98
    %255 = vmatpush.msra.mxu0 %v97
    %256 = vmatmul.f32.gmra.mxu0 %v129
    %v257 = vpop.f32.mrf.mxu0
    %v258 = vadd.f32 %v238, %v257
    %259 = vdwg.mxu0
    %260 = vmatpush.msra.mxu0 0.0
    %261 = vmatpush.msra.mxu0 0.0
    %262 = vmatpush.msra.mxu0 0.0
    %263 = vmatpush.msra.mxu0 0.0
    %264 = vmatpush.msra.mxu0 0.0
    %265 = vmatpush.msra.mxu0 0.0
    %266 = vmatpush.msra.mxu0 0.0
    %267 = vmatpush.msra.mxu0 0.0
    %268 = vmatpush.msra.mxu0 0.0
    %269 = vmatpush.msra.mxu0 0.0
    %270 = vmatpush.msra.mxu0 0.0
    %271 = vmatpush.msra.mxu0 0.0
    %272 = vmatpush.msra.mxu0 0.0
    %273 = vmatpush.msra.mxu0 0.0
    %274 = vmatpush.msra.mxu0 %v114
    %275 = vmatpush.msra.mxu0 %v113
    %276 = vmatmul.f32.gmra.mxu0 %v138
    %v277 = vpop.f32.mrf.mxu0
    %v278 = vadd.f32 %v258, %v277
    %279 = vdwg.mxu0
    %vm280 = vcmask 74752
    %281 = vst.msk [vmem:[#allocation2] sm:$0x3] %vm280, %v278
    // Predicated region
    $region14: #{cnn_forward.5} parent=1 // pred_check
      _
    $region15: #{cnn_forward.5} parent=1 // pred_check_branch
      %283 = sbr.rel (0) target = $region17
    $region16: #{cnn_forward.5} parent=1 // pred_region
      %285 = vsyncadd [#allocation3], 0
      %s287 = sshll.u32 [#allocation2], 4
      %s288 = int_to_ptr.vmem [resolvable:$true] %s287
      %s289 = sshll.u32 %s3, 4
      %s290 = int_to_ptr.hbm [resolvable:$true] %s289
      %292 = dma.vmem_to_hbm [thread:$0]  %s288, 32, %s290, [#allocation3]
    $region17: #{cnn_forward.5} parent=1 // pred_fallthru
      _
    // Predicated region
    $region18: #{cnn_forward.5} parent=1 // pred_check
      _
    $region19: #{cnn_forward.5} parent=1 // pred_check_branch
      %294 = sbr.rel (0) target = $region21
    $region20: #{cnn_forward.5} parent=1 // pred_region
      %296 = dma.done [#allocation3], 32
    $region21: #{cnn_forward.5} parent=1 // pred_fallthru
      _
    %297 = vsyncpa [#allocation3], 1

</llo_original>
